<compile_context>
chip_gen: v5e
topology: v5e:2x2
jax: 0.10.0
libtpu: 0.0.40
codegen_flags: <defaults>
</compile_context>

<pallas_src>
import jax
import jax.numpy as jnp
import numpy as np
from jax.experimental import pallas as pl
from jax.experimental.pallas import tpu as pltpu


def _round_up(x, m):
    return (x + m - 1) // m * m


# --------------------------------------------------------------------------
# Pass 1: tiled conv matmul (K-accumulated in VMEM) + per-row-tile partial
# channel sum / sum-of-squares for BatchNorm batch statistics.
# --------------------------------------------------------------------------
def conv_stats_kernel(p_ref, w_ref, y_ref, sum_ref, sq_ref, acc_ref):
    k = pl.program_id(1)

    @pl.when(k == 0)
    def _():
        acc_ref[...] = jnp.zeros_like(acc_ref)

    acc_ref[...] += jnp.dot(p_ref[...], w_ref[...],
                            preferred_element_type=jnp.float32)

    @pl.when(k == pl.num_programs(1) - 1)
    def _():
        y = acc_ref[...]
        y_ref[...] = y
        sum_ref[...] = jnp.sum(y, axis=0, keepdims=True)
        sq_ref[...] = jnp.sum(y * y, axis=0, keepdims=True)


# --------------------------------------------------------------------------
# Pass 2: BatchNorm affine form (y * scale + shift) + LeakyReLU(0.2).
# --------------------------------------------------------------------------
def bn_lrelu_kernel(y_ref, scale_ref, shift_ref, o_ref):
    z = y_ref[...] * scale_ref[...] + shift_ref[...]
    o_ref[...] = jnp.where(z >= 0, z, 0.2 * z)


def unet_down_forward(x, w, gamma, beta, *, eps=1e-5):
    """x: [N, Cin, H, W] (NCHW), w: [Cout, Cin, 4, 4].  Returns [N, Cout, H/2, W/2]."""
    N, Cin, H, W = x.shape
    Cout = w.shape[0]
    Ho, Wo = H // 2, W // 2
    M = N * Ho * Wo
    K = Cin * 16

    # lane-dense channel padding (unmasked stores)
    C_pad = _round_up(Cout, 128)

    # row tiling: big tiles, pad M so every tile is full (padded rows are zero)
    TM = 512
    tm = min(TM, _round_up(M, 8))
    M_pad = _round_up(M, tm)

    # K tiling: keep per-buffer sizes bounded (v7x 64 MiB VMEM)
    TK = 512
    if K <= TK:
        tk, K_pad = K, K
    else:
        tk, K_pad = TK, _round_up(K, TK)

    # ---- im2col glue in NHWC (k=4, s=2, p=1) ----
    # TODO(synk): patch extraction could be fused into the kernel via manual DMA
    # to avoid materializing the patches array in HBM entirely.
    xp = jnp.pad(x, ((0, 0), (0, 0), (1, 1), (1, 1)))
    xh = xp.transpose(0, 2, 3, 1)                            # [N, H+2, W+2, Cin]
    cols = [xh[:, i:i + 2 * Ho:2, j:j + 2 * Wo:2, :]         # each [N, Ho, Wo, Cin]
            for i in range(4) for j in range(4)]
    patches = jnp.concatenate(cols, axis=-1).reshape(M, K)   # (kh, kw, cin) order
    wmat = w.transpose(2, 3, 1, 0).reshape(K, Cout)          # matching order

    patches = jnp.pad(patches, ((0, M_pad - M), (0, K_pad - K))).astype(jnp.bfloat16)
    wmat = jnp.pad(wmat, ((0, K_pad - K), (0, C_pad - Cout))).astype(jnp.bfloat16)

    n_m = M_pad // tm
    n_k = K_pad // tk

    cost1 = pl.CostEstimate(
        flops=2 * M_pad * K_pad * C_pad + 3 * M_pad * C_pad,
        transcendentals=0,
        bytes_accessed=(patches.size * 2 + wmat.size * 2
                        + M_pad * C_pad * 4 + 2 * n_m * C_pad * 4))

    y, psum, psq = pl.pallas_call(
        conv_stats_kernel,
        out_shape=(jax.ShapeDtypeStruct((M_pad, C_pad), jnp.float32),
                   jax.ShapeDtypeStruct((n_m, C_pad), jnp.float32),
                   jax.ShapeDtypeStruct((n_m, C_pad), jnp.float32)),
        grid_spec=pltpu.PrefetchScalarGridSpec(
            num_scalar_prefetch=0,
            grid=(n_m, n_k),
            in_specs=[pl.BlockSpec((tm, tk), lambda i, k: (i, k)),
                      pl.BlockSpec((tk, C_pad), lambda i, k: (k, 0))],
            out_specs=(pl.BlockSpec((tm, C_pad), lambda i, k: (i, 0)),
                       pl.BlockSpec((1, C_pad), lambda i, k: (i, 0)),
                       pl.BlockSpec((1, C_pad), lambda i, k: (i, 0))),
            scratch_shapes=[pltpu.VMEM((tm, C_pad), jnp.float32)]),
        compiler_params=pltpu.CompilerParams(
            dimension_semantics=("parallel", "arbitrary"),
            vmem_limit_bytes=48 * 1024 * 1024),
        cost_estimate=cost1,
    )(patches, wmat)

    # ---- BatchNorm statistics (training-mode, biased variance), f32 in JAX ----
    # Padded rows are all-zero patches -> exactly zero contribution; divide by real M.
    s = jnp.sum(psum, axis=0, keepdims=True)                  # [1, C_pad]
    sq = jnp.sum(psq, axis=0, keepdims=True)                  # [1, C_pad]
    mean = s / M
    var = jnp.maximum(sq / M - mean * mean, 0.0)
    inv_std = jax.lax.rsqrt(var + eps)
    gpad = jnp.pad(gamma.astype(jnp.float32), (0, C_pad - Cout)).reshape(1, C_pad)
    bpad = jnp.pad(beta.astype(jnp.float32), (0, C_pad - Cout)).reshape(1, C_pad)
    scale = gpad * inv_std                                    # [1, C_pad]
    shift = bpad - mean * scale                               # [1, C_pad]

    cost2 = pl.CostEstimate(flops=3 * M_pad * C_pad, transcendentals=0,
                            bytes_accessed=2 * M_pad * C_pad * 4)

    # ---- Pass 2: normalize + LeakyReLU(0.2), lane-dense output ----
    out = pl.pallas_call(
        bn_lrelu_kernel,
        out_shape=jax.ShapeDtypeStruct((M_pad, C_pad), jnp.float32),
        grid_spec=pltpu.PrefetchScalarGridSpec(
            num_scalar_prefetch=0,
            grid=(n_m,),
            in_specs=[pl.BlockSpec((tm, C_pad), lambda i: (i, 0)),
                      pl.BlockSpec((1, C_pad), lambda i: (0, 0)),
                      pl.BlockSpec((1, C_pad), lambda i: (0, 0))],
            out_specs=pl.BlockSpec((tm, C_pad), lambda i: (i, 0))),
        compiler_params=pltpu.CompilerParams(
            dimension_semantics=("parallel",),
            vmem_limit_bytes=48 * 1024 * 1024),
        cost_estimate=cost2,
    )(y, scale, shift)

    # TODO(synk): dropout > 0 path not implemented (module default dropout=0.0 is a no-op).

    # slice off channel / row padding and return NCHW
    return out[:M, :Cout].reshape(N, Ho, Wo, Cout).transpose(0, 3, 1, 2)


def _reference(x, w, gamma, beta, eps=1e-5):
    """Pure-JAX reference mirroring the PyTorch module (training-mode BN)."""
    y = jax.lax.conv_general_dilated(
        x, w, window_strides=(2, 2), padding=[(1, 1), (1, 1)],
        dimension_numbers=("NCHW", "OIHW", "NCHW"))
    mean = y.mean(axis=(0, 2, 3), keepdims=True)
    var = y.var(axis=(0, 2, 3), keepdims=True)
    z = (y - mean) / jnp.sqrt(var + eps)
    z = z * gamma.reshape(1, -1, 1, 1) + beta.reshape(1, -1, 1, 1)
    return jnp.where(z >= 0, z, 0.2 * z)


if __name__ == "__main__":
    key = jax.random.PRNGKey(0)
    kx, kw = jax.random.split(key)

    N, Cin, H, W = 2, 4, 16, 16
    Cout = 8

    x = jax.random.normal(kx, (N, Cin, H, W), dtype=jnp.float32)
    w = jax.random.normal(kw, (Cout, Cin, 4, 4), dtype=jnp.float32) * 0.02
    gamma = jnp.ones((Cout,), dtype=jnp.float32)
    beta = jnp.zeros((Cout,), dtype=jnp.float32)

    out = unet_down_forward(x, w, gamma, beta)
    out = jax.block_until_ready(out)

    ref = _reference(x, w, gamma, beta)
    np.testing.assert_allclose(np.asarray(out), np.asarray(ref), rtol=2e-2, atol=2e-2)
    assert out.shape == (N, Cout, H // 2, W // 2)

    print("KERNEL_OK")
</pallas_src>

<mosaic_0001>
module attributes {stable_mosaic.version = 11 : i64} {
  func.func @conv_stats_kernel(%arg0: i32, %arg1: i32, %arg2: memref<128x64xbf16, #tpu.memory_space<vmem>>, %arg3: memref<64x128xbf16, #tpu.memory_space<vmem>>, %arg4: memref<128x128xf32, #tpu.memory_space<vmem>>, %arg5: memref<1x128xf32, #tpu.memory_space<vmem>>, %arg6: memref<1x128xf32, #tpu.memory_space<vmem>>, %arg7: memref<128x128xf32, #tpu.memory_space<vmem>>) attributes {dimension_semantics = [#tpu.dimension_semantics<parallel>, #tpu.dimension_semantics<arbitrary>], iteration_bounds = array<i64: 1, 1>, scalar_prefetch = 0 : i64, scratch_operands = 1 : i64, tpu.core_type = #tpu.core_type<tc>, window_params = [{transform_indices = @transform_0, window_bounds = array<i64: 128, 64>}, {transform_indices = @transform_1, window_bounds = array<i64: 64, 128>}, {transform_indices = @transform_2, window_bounds = array<i64: 128, 128>}, {transform_indices = @transform_3, window_bounds = array<i64: 1, 128>}, {transform_indices = @transform_4, window_bounds = array<i64: 1, 128>}]} {
    %c0_i32 = arith.constant 0 : i32
    %0 = arith.cmpi eq, %arg1, %c0_i32 : i32
    %1 = arith.extui %0 : i1 to i32
    %c0_i32_0 = arith.constant 0 : i32
    %2 = arith.cmpi ne, %1, %c0_i32_0 : i32
    scf.if %2 {
      %cst_10 = arith.constant 0.000000e+00 : f32
      %12 = vector.broadcast %cst_10 : f32 to vector<128x128xf32>
      %c0_11 = arith.constant 0 : index
      %c0_12 = arith.constant 0 : index
      %13 = vector.load %arg7[%c0_11, %c0_12] : memref<128x128xf32, #tpu.memory_space<vmem>>, vector<128x128xf32>
      tpu.vector_store %arg7[%c0_11, %c0_12], %12 {strides = array<i32>} : memref<128x128xf32, #tpu.memory_space<vmem>>, vector<128x128xf32>,
    } else {
    }
    %c0 = arith.constant 0 : index
    %c0_1 = arith.constant 0 : index
    %3 = vector.load %arg7[%c0, %c0_1] : memref<128x128xf32, #tpu.memory_space<vmem>>, vector<128x128xf32>
    %c0_2 = arith.constant 0 : index
    %c0_3 = arith.constant 0 : index
    %4 = vector.load %arg2[%c0_2, %c0_3] : memref<128x64xbf16, #tpu.memory_space<vmem>>, vector<128x64xbf16>
    %c0_4 = arith.constant 0 : index
    %c0_5 = arith.constant 0 : index
    %5 = vector.load %arg3[%c0_4, %c0_5] : memref<64x128xbf16, #tpu.memory_space<vmem>>, vector<64x128xbf16>
    %cst = arith.constant dense<0.000000e+00> : vector<128x128xf32>
    %6 = tpu.matmul %4, %5, %cst {dimension_numbers = #tpu.dot_dimension_numbers<[1], [0], [0], [1], [0, 0, 1, 1], [], []>} : vector<128x64xbf16>, vector<64x128xbf16>, vector<128x128xf32> -> vector<128x128xf32>
    %7 = arith.addf %3, %6 : vector<128x128xf32>
    %c0_6 = arith.constant 0 : index
    %c0_7 = arith.constant 0 : index
    %8 = vector.load %arg7[%c0_6, %c0_7] : memref<128x128xf32, #tpu.memory_space<vmem>>, vector<128x128xf32>
    tpu.vector_store %arg7[%c0_6, %c0_7], %7 {strides = array<i32>} : memref<128x128xf32, #tpu.memory_space<vmem>>, vector<128x128xf32>,
    %c0_i32_8 = arith.constant 0 : i32
    %9 = arith.cmpi eq, %arg1, %c0_i32_8 : i32
    %10 = arith.extui %9 : i1 to i32
    %c0_i32_9 = arith.constant 0 : i32
    %11 = arith.cmpi ne, %10, %c0_i32_9 : i32
    scf.if %11 {
      %c0_10 = arith.constant 0 : index
      %c0_11 = arith.constant 0 : index
      %12 = vector.load %arg7[%c0_10, %c0_11] : memref<128x128xf32, #tpu.memory_space<vmem>>, vector<128x128xf32>
      %c0_12 = arith.constant 0 : index
      %c0_13 = arith.constant 0 : index
      %13 = vector.load %arg4[%c0_12, %c0_13] : memref<128x128xf32, #tpu.memory_space<vmem>>, vector<128x128xf32>
      tpu.vector_store %arg4[%c0_12, %c0_13], %12 {strides = array<i32>} : memref<128x128xf32, #tpu.memory_space<vmem>>, vector<128x128xf32>,
      %cst_14 = arith.constant dense<0.000000e+00> : vector<128xf32>
      %14 = vector.multi_reduction <add>, %12, %cst_14 [0] : vector<128x128xf32> to vector<128xf32>
      %15 = vector.shape_cast %14 : vector<128xf32> to vector<1x128xf32>
      %c0_15 = arith.constant 0 : index
      %c0_16 = arith.constant 0 : index
      %16 = vector.load %arg5[%c0_15, %c0_16] : memref<1x128xf32, #tpu.memory_space<vmem>>, vector<1x128xf32>
      tpu.vector_store %arg5[%c0_15, %c0_16], %15 {strides = array<i32>} : memref<1x128xf32, #tpu.memory_space<vmem>>, vector<1x128xf32>,
      %17 = arith.mulf %12, %12 : vector<128x128xf32>
      %cst_17 = arith.constant dense<0.000000e+00> : vector<128xf32>
      %18 = vector.multi_reduction <add>, %17, %cst_17 [0] : vector<128x128xf32> to vector<128xf32>
      %19 = vector.shape_cast %18 : vector<128xf32> to vector<1x128xf32>
      %c0_18 = arith.constant 0 : index
      %c0_19 = arith.constant 0 : index
      %20 = vector.load %arg6[%c0_18, %c0_19] : memref<1x128xf32, #tpu.memory_space<vmem>>, vector<1x128xf32>
      tpu.vector_store %arg6[%c0_18, %c0_19], %19 {strides = array<i32>} : memref<1x128xf32, #tpu.memory_space<vmem>>, vector<1x128xf32>,
    } else {
    }
    return
  }
  func.func @transform_0(%arg0: i32, %arg1: i32) -> (i32, i32) {
    %c0_i32 = arith.constant 0 : i32
    return %arg0, %arg1 : i32, i32
  }
  func.func @transform_1(%arg0: i32, %arg1: i32) -> (i32, i32) {
    %c0_i32 = arith.constant 0 : i32
    %c0_i32_0 = arith.constant 0 : i32
    return %arg1, %c0_i32 : i32, i32
  }
  func.func @transform_2(%arg0: i32, %arg1: i32) -> (i32, i32) {
    %c0_i32 = arith.constant 0 : i32
    %c0_i32_0 = arith.constant 0 : i32
    return %arg0, %c0_i32 : i32, i32
  }
  func.func @transform_3(%arg0: i32, %arg1: i32) -> (i32, i32) {
    %c0_i32 = arith.constant 0 : i32
    %c0_i32_0 = arith.constant 0 : i32
    return %arg0, %c0_i32 : i32, i32
  }
  func.func @transform_4(%arg0: i32, %arg1: i32) -> (i32, i32) {
    %c0_i32 = arith.constant 0 : i32
    %c0_i32_0 = arith.constant 0 : i32
    return %arg0, %c0_i32 : i32, i32
  }
}

</mosaic_0001>

<llo_original>
// kernel: tpu_custom_call.1
$region0: #{tpu_custom_call.1}
  #allocation0 [shape = 'u32[]', space=smem, size = 0x4, offset = 0x4, fixed_abs, tag = 'smem constant byte address 0x4 - core index']
  #allocation1 [shape = 'u32[72,128]{1,0:T(1,128)}', space=vmem, size = 0x9000, scoped, tag = 'internal scratch']
  #allocation2 [shape = 'f32[128,128]{1,0:T(8,128)}', space=vmem, size = 0x10000, scoped, tag = 'scratch operand']
  %s0 = inlined_call_operand.vmem [shape: bf16[128,64], index: 0, kind: input, shape index: {}]
  %s1 = inlined_call_operand.vmem [shape: bf16[64,128], index: 1, kind: input, shape index: {}]
  %s2 = inlined_call_operand.hbm [shape: f32[128,128], index: 2, kind: output, shape index: {0}]
  %s3 = inlined_call_operand.hbm [shape: f32[1,128], index: 3, kind: output, shape index: {1}]
  %s4 = inlined_call_operand.hbm [shape: f32[1,128], index: 4, kind: output, shape index: {2}]
  %5 = xla_tuple %s2, %s3, %s4
  %s6 = sld [smem:[#allocation0]]
  $region42: #{tpu_custom_call.1} parent=0
    _
  %s8 = ssub.s32 1, %s6
  %s9 = scalar_select 0, %s8, %s6
  $region1: #{tpu_custom_call.1} parent=0
    #allocation3 [shape = 'u8[65536]{0}', space=vmem, size = 0x10000, scoped, tag = 'output window, operand 0, single buffered']
    #allocation4 [shape = 's32[1]{0}', space=sflag, size = 0x4, scoped, tag = 'scoped memory for tpu_custom_call.1']
    #allocation5 [shape = 'u8[512]{0}', space=vmem, size = 0x400, scoped, tag = 'output window, operand 1, single buffered']
    #allocation6 [shape = 's32[1]{0}', space=sflag, size = 0x4, scoped, tag = 'scoped memory for tpu_custom_call.1']
    #allocation7 [shape = 'u8[512]{0}', space=vmem, size = 0x400, scoped, tag = 'output window, operand 2, single buffered']
    %10 = vsyncpa [#allocation4], 0
    %11 = vsyncpa [#allocation6], 0
    // Predicated region
    $region2: #{tpu_custom_call.1} parent=1 // pred_check
      _
    $region3: #{tpu_custom_call.1} parent=1 // pred_check_branch
      %13 = sbr.rel (0) target = $region5
    $region4: #{tpu_custom_call.1} parent=1 // pred_region
      _
    $region5: #{tpu_custom_call.1} parent=1 // pred_fallthru
      _
    // Predicated region
    $region6: #{tpu_custom_call.1} parent=1 // pred_check
      _
    $region7: #{tpu_custom_call.1} parent=1 // pred_check_branch
      %15 = sbr.rel (0) target = $region9
    $region8: #{tpu_custom_call.1} parent=1 // pred_region
      _
    $region9: #{tpu_custom_call.1} parent=1 // pred_fallthru
      _
    %p17 = scmp.eq.s32.totalorder 0, 0
    // Predicated region
    $region10: #{tpu_custom_call.1} parent=1 // pred_check
      %p18 = pneg %p17
    $region11: #{tpu_custom_call.1} parent=1 // pred_check_branch
      %20 = sbr.rel (%p18) target = $region13
    $region12: #{tpu_custom_call.1} parent=1 // pred_region
      %21 = vst [vmem:[#allocation2] sm:$0xff] 0.0
      %22 = vst [vmem:[#allocation2 + $0x8] sm:$0xff] 0.0
      %23 = vst [vmem:[#allocation2 + $0x10] sm:$0xff] 0.0
      %24 = vst [vmem:[#allocation2 + $0x18] sm:$0xff] 0.0
      %25 = vst [vmem:[#allocation2 + $0x20] sm:$0xff] 0.0
      %26 = vst [vmem:[#allocation2 + $0x28] sm:$0xff] 0.0
      %27 = vst [vmem:[#allocation2 + $0x30] sm:$0xff] 0.0
      %28 = vst [vmem:[#allocation2 + $0x38] sm:$0xff] 0.0
      %29 = vst [vmem:[#allocation2 + $0x40] sm:$0xff] 0.0
      %30 = vst [vmem:[#allocation2 + $0x48] sm:$0xff] 0.0
      %31 = vst [vmem:[#allocation2 + $0x50] sm:$0xff] 0.0
      %32 = vst [vmem:[#allocation2 + $0x58] sm:$0xff] 0.0
      %33 = vst [vmem:[#allocation2 + $0x60] sm:$0xff] 0.0
      %34 = vst [vmem:[#allocation2 + $0x68] sm:$0xff] 0.0
      %35 = vst [vmem:[#allocation2 + $0x70] sm:$0xff] 0.0
      %36 = vst [vmem:[#allocation2 + $0x78] sm:$0xff] 0.0
    $region13: #{tpu_custom_call.1} parent=1 // pred_fallthru
      _
    %v37 = vld [vmem:[#allocation2] sm:$0xff]
    %v38 = vld [vmem:[#allocation2 + $0x8] sm:$0xff]
    %v39 = vld [vmem:[#allocation2 + $0x10] sm:$0xff]
    %v40 = vld [vmem:[#allocation2 + $0x18] sm:$0xff]
    %v41 = vld [vmem:[#allocation2 + $0x20] sm:$0xff]
    %v42 = vld [vmem:[#allocation2 + $0x28] sm:$0xff]
    %v43 = vld [vmem:[#allocation2 + $0x30] sm:$0xff]
    %v44 = vld [vmem:[#allocation2 + $0x38] sm:$0xff]
    %v45 = vld [vmem:[#allocation2 + $0x40] sm:$0xff]
    %v46 = vld [vmem:[#allocation2 + $0x48] sm:$0xff]
    %v47 = vld [vmem:[#allocation2 + $0x50] sm:$0xff]
    %v48 = vld [vmem:[#allocation2 + $0x58] sm:$0xff]
    %v49 = vld [vmem:[#allocation2 + $0x60] sm:$0xff]
    %v50 = vld [vmem:[#allocation2 + $0x68] sm:$0xff]
    %v51 = vld [vmem:[#allocation2 + $0x70] sm:$0xff]
    %v52 = vld [vmem:[#allocation2 + $0x78] sm:$0xff]
    %v53 = vld [vmem:[%s0] sm:$0xf]
    %v54 = vld [vmem:[%s0 + $0x4] sm:$0xf]
    %v55 = vld [vmem:[%s0 + $0x8] sm:$0xf]
    %v56 = vld [vmem:[%s0 + $0xc] sm:$0xf]
    %v57 = vld [vmem:[%s0 + $0x10] sm:$0xf]
    %v58 = vld [vmem:[%s0 + $0x14] sm:$0xf]
    %v59 = vld [vmem:[%s0 + $0x18] sm:$0xf]
    %v60 = vld [vmem:[%s0 + $0x1c] sm:$0xf]
    %v61 = vld [vmem:[%s0 + $0x20] sm:$0xf]
    %v62 = vld [vmem:[%s0 + $0x24] sm:$0xf]
    %v63 = vld [vmem:[%s0 + $0x28] sm:$0xf]
    %v64 = vld [vmem:[%s0 + $0x2c] sm:$0xf]
    %v65 = vld [vmem:[%s0 + $0x30] sm:$0xf]
    %v66 = vld [vmem:[%s0 + $0x34] sm:$0xf]
    %v67 = vld [vmem:[%s0 + $0x38] sm:$0xf]
    %v68 = vld [vmem:[%s0 + $0x3c] sm:$0xf]
    %v69 = vld [vmem:[%s1] sm:$0xf]
    %v70 = vld [vmem:[%s1 + $0x4] sm:$0xf]
    %v71 = vld [vmem:[%s1 + $0x8] sm:$0xf]
    %v72 = vld [vmem:[%s1 + $0xc] sm:$0xf]
    %v73 = vld [vmem:[%s1 + $0x10] sm:$0xf]
    %v74 = vld [vmem:[%s1 + $0x14] sm:$0xf]
    %v75 = vld [vmem:[%s1 + $0x18] sm:$0xf]
    %v76 = vld [vmem:[%s1 + $0x1c] sm:$0xf]
    %v93 = vunpack.c.l.b16 %v53
    %v94 = vunpack.c.l.b16 %v54
    %v95 = vunpack.c.l.b16 %v55
    %v96 = vunpack.c.l.b16 %v56
    %v97 = vunpack.c.l.b16 %v57
    %v98 = vunpack.c.l.b16 %v58
    %v99 = vunpack.c.l.b16 %v59
    %v100 = vunpack.c.l.b16 %v60
    %v101 = vunpack.c.l.b16 %v61
    %v102 = vunpack.c.l.b16 %v62
    %v103 = vunpack.c.l.b16 %v63
    %v104 = vunpack.c.l.b16 %v64
    %v105 = vunpack.c.l.b16 %v65
    %v106 = vunpack.c.l.b16 %v66
    %v107 = vunpack.c.l.b16 %v67
    %v108 = vunpack.c.l.b16 %v68
    %v109 = vpack.c.b16 %v94, %v93
    %v110 = vpack.c.b16 %v96, %v95
    %v111 = vpack.c.b16 %v98, %v97
    %v112 = vpack.c.b16 %v100, %v99
    %v113 = vpack.c.b16 %v102, %v101
    %v114 = vpack.c.b16 %v104, %v103
    %v115 = vpack.c.b16 %v106, %v105
    %v116 = vpack.c.b16 %v108, %v107
    %v125 = vunpack.c.l.b16 %v69
    %v126 = vunpack.c.l.b16 %v70
    %v127 = vunpack.c.l.b16 %v71
    %v128 = vunpack.c.l.b16 %v72
    %v129 = vunpack.c.l.b16 %v73
    %v130 = vunpack.c.l.b16 %v74
    %v131 = vunpack.c.l.b16 %v75
    %v132 = vunpack.c.l.b16 %v76
    %v133 = vpack.c.b16 %v126, %v125
    %v134 = vpack.c.b16 %v128, %v127
    %v135 = vpack.c.b16 %v130, %v129
    %v136 = vpack.c.b16 %v132, %v131
    %vm141 = vcmask 523264
    %v143 = vsel %vm141, %v109, 0
    %v146 = vsel %vm141, %v110, 0
    %v149 = vsel %vm141, %v111, 0
    %v152 = vsel %vm141, %v112, 0
    %v155 = vsel %vm141, %v113, 0
    %v158 = vsel %vm141, %v114, 0
    %v161 = vsel %vm141, %v115, 0
    %v164 = vsel %vm141, %v116, 0
    %166 = vmatpush.bf16.msra.mxu0 0
    %167 = vmatpush.bf16.msra.mxu0 0
    %168 = vmatpush.bf16.msra.mxu0 0
    %169 = vmatpush.bf16.msra.mxu0 0
    %170 = vmatpush.bf16.msra.mxu0 %v136
    %171 = vmatpush.bf16.msra.mxu0 %v135
    %172 = vmatpush.bf16.msra.mxu0 %v134
    %173 = vmatpush.bf16.msra.mxu0 %v133
    %174 = vmatmul.bf16.gmra.mxu0 %v143
    %v175 = vpop.f32.mrf.mxu0
    %v176 = vadd.f32 0.0, %v175
    %v177 = vpop.f32.mrf.mxu0
    %v178 = vadd.f32 0.0, %v177
    %179 = vmatmul.bf16.gmra.mxu0 %v146
    %v180 = vpop.f32.mrf.mxu0
    %v181 = vadd.f32 0.0, %v180
    %v182 = vpop.f32.mrf.mxu0
    %v183 = vadd.f32 0.0, %v182
    %184 = vmatmul.bf16.gmra.mxu0 %v149
    %v185 = vpop.f32.mrf.mxu0
    %v186 = vadd.f32 0.0, %v185
    %v187 = vpop.f32.mrf.mxu0
    %v188 = vadd.f32 0.0, %v187
    %189 = vmatmul.bf16.gmra.mxu0 %v152
    %v190 = vpop.f32.mrf.mxu0
    %v191 = vadd.f32 0.0, %v190
    %v192 = vpop.f32.mrf.mxu0
    %v193 = vadd.f32 0.0, %v192
    %194 = vmatmul.bf16.gmra.mxu0 %v155
    %v195 = vpop.f32.mrf.mxu0
    %v196 = vadd.f32 0.0, %v195
    %v197 = vpop.f32.mrf.mxu0
    %v198 = vadd.f32 0.0, %v197
    %199 = vmatmul.bf16.gmra.mxu0 %v158
    %v200 = vpop.f32.mrf.mxu0
    %v201 = vadd.f32 0.0, %v200
    %v202 = vpop.f32.mrf.mxu0
    %v203 = vadd.f32 0.0, %v202
    %204 = vmatmul.bf16.gmra.mxu0 %v161
    %v205 = vpop.f32.mrf.mxu0
    %v206 = vadd.f32 0.0, %v205
    %v207 = vpop.f32.mrf.mxu0
    %v208 = vadd.f32 0.0, %v207
    %209 = vmatmul.bf16.gmra.mxu0 %v164
    %v210 = vpop.f32.mrf.mxu0
    %v211 = vadd.f32 0.0, %v210
    %v212 = vpop.f32.mrf.mxu0
    %v213 = vadd.f32 0.0, %v212
    %214 = vdwg.mxu0
    %v215 = vadd.f32 %v37, %v176
    %v216 = vadd.f32 %v38, %v178
    %v217 = vadd.f32 %v39, %v181
    %v218 = vadd.f32 %v40, %v183
    %v219 = vadd.f32 %v41, %v186
    %v220 = vadd.f32 %v42, %v188
    %v221 = vadd.f32 %v43, %v191
    %v222 = vadd.f32 %v44, %v193
    %v223 = vadd.f32 %v45, %v196
    %v224 = vadd.f32 %v46, %v198
    %v225 = vadd.f32 %v47, %v201
    %v226 = vadd.f32 %v48, %v203
    %v227 = vadd.f32 %v49, %v206
    %v228 = vadd.f32 %v50, %v208
    %v229 = vadd.f32 %v51, %v211
    %v230 = vadd.f32 %v52, %v213
    %231 = vst [vmem:[#allocation2] sm:$0xff] %v215
    %232 = vst [vmem:[#allocation2 + $0x8] sm:$0xff] %v216
    %233 = vst [vmem:[#allocation2 + $0x10] sm:$0xff] %v217
    %234 = vst [vmem:[#allocation2 + $0x18] sm:$0xff] %v218
    %235 = vst [vmem:[#allocation2 + $0x20] sm:$0xff] %v219
    %236 = vst [vmem:[#allocation2 + $0x28] sm:$0xff] %v220
    %237 = vst [vmem:[#allocation2 + $0x30] sm:$0xff] %v221
    %238 = vst [vmem:[#allocation2 + $0x38] sm:$0xff] %v222
    %239 = vst [vmem:[#allocation2 + $0x40] sm:$0xff] %v223
    %240 = vst [vmem:[#allocation2 + $0x48] sm:$0xff] %v224
    %241 = vst [vmem:[#allocation2 + $0x50] sm:$0xff] %v225
    %242 = vst [vmem:[#allocation2 + $0x58] sm:$0xff] %v226
    %243 = vst [vmem:[#allocation2 + $0x60] sm:$0xff] %v227
    %244 = vst [vmem:[#allocation2 + $0x68] sm:$0xff] %v228
    %245 = vst [vmem:[#allocation2 + $0x70] sm:$0xff] %v229
    %246 = vst [vmem:[#allocation2 + $0x78] sm:$0xff] %v230
    // Predicated region
    $region14: #{tpu_custom_call.1} parent=1 // pred_check
      %p247 = pneg %p17
    $region15: #{tpu_custom_call.1} parent=1 // pred_check_branch
      %249 = sbr.rel (%p247) target = $region17
    $region16: #{tpu_custom_call.1} parent=1 // pred_region
      %v250 = vld [vmem:[#allocation2] sm:$0xff]
      %v251 = vld [vmem:[#allocation2 + $0x8] sm:$0xff]
      %v252 = vld [vmem:[#allocation2 + $0x10] sm:$0xff]
      %v253 = vld [vmem:[#allocation2 + $0x18] sm:$0xff]
      %v254 = vld [vmem:[#allocation2 + $0x20] sm:$0xff]
      %v255 = vld [vmem:[#allocation2 + $0x28] sm:$0xff]
      %v256 = vld [vmem:[#allocation2 + $0x30] sm:$0xff]
      %v257 = vld [vmem:[#allocation2 + $0x38] sm:$0xff]
      %v258 = vld [vmem:[#allocation2 + $0x40] sm:$0xff]
      %v259 = vld [vmem:[#allocation2 + $0x48] sm:$0xff]
      %v260 = vld [vmem:[#allocation2 + $0x50] sm:$0xff]
      %v261 = vld [vmem:[#allocation2 + $0x58] sm:$0xff]
      %v262 = vld [vmem:[#allocation2 + $0x60] sm:$0xff]
      %v263 = vld [vmem:[#allocation2 + $0x68] sm:$0xff]
      %v264 = vld [vmem:[#allocation2 + $0x70] sm:$0xff]
      %v265 = vld [vmem:[#allocation2 + $0x78] sm:$0xff]
      %266 = vst [vmem:[#allocation3] sm:$0xff] %v250
      %267 = vst [vmem:[#allocation3 + $0x8] sm:$0xff] %v251
      %268 = vst [vmem:[#allocation3 + $0x10] sm:$0xff] %v252
      %269 = vst [vmem:[#allocation3 + $0x18] sm:$0xff] %v253
      %270 = vst [vmem:[#allocation3 + $0x20] sm:$0xff] %v254
      %271 = vst [vmem:[#allocation3 + $0x28] sm:$0xff] %v255
      %272 = vst [vmem:[#allocation3 + $0x30] sm:$0xff] %v256
      %273 = vst [vmem:[#allocation3 + $0x38] sm:$0xff] %v257
      %274 = vst [vmem:[#allocation3 + $0x40] sm:$0xff] %v258
      %275 = vst [vmem:[#allocation3 + $0x48] sm:$0xff] %v259
      %276 = vst [vmem:[#allocation3 + $0x50] sm:$0xff] %v260
      %277 = vst [vmem:[#allocation3 + $0x58] sm:$0xff] %v261
      %278 = vst [vmem:[#allocation3 + $0x60] sm:$0xff] %v262
      %279 = vst [vmem:[#allocation3 + $0x68] sm:$0xff] %v263
      %280 = vst [vmem:[#allocation3 + $0x70] sm:$0xff] %v264
      %281 = vst [vmem:[#allocation3 + $0x78] sm:$0xff] %v265
      %v282 = vadd.f32 %v250, %v251
      %v283 = vadd.f32 %v282, %v252
      %v284 = vadd.f32 %v283, %v253
      %v285 = vadd.f32 %v284, %v254
      %v286 = vadd.f32 %v285, %v255
      %v287 = vadd.f32 %v286, %v256
      %v288 = vadd.f32 %v287, %v257
      %v289 = vadd.f32 %v288, %v258
      %v290 = vadd.f32 %v289, %v259
      %v291 = vadd.f32 %v290, %v260
      %v292 = vadd.f32 %v291, %v261
      %v293 = vadd.f32 %v292, %v262
      %v294 = vadd.f32 %v293, %v263
      %v295 = vadd.f32 %v294, %v264
      %v296 = vadd.f32 %v295, %v265
      %v297 = vrot.slane %v296, 4
      %v298 = vadd.f32 %v296, %v297
      %v299 = vrot.slane %v298, 2
      %v300 = vadd.f32 %v298, %v299
      %v301 = vrot.slane %v300, 1
      %v302 = vadd.f32 %v300, %v301
      %303 = vst [vmem:[#allocation5] sm:$0x1] %v302
      %v304 = vmul.f32 %v250, %v250
      %v305 = vmul.f32 %v251, %v251
      %v306 = vmul.f32 %v252, %v252
      %v307 = vmul.f32 %v253, %v253
      %v308 = vmul.f32 %v254, %v254
      %v309 = vmul.f32 %v255, %v255
      %v310 = vmul.f32 %v256, %v256
      %v311 = vmul.f32 %v257, %v257
      %v312 = vmul.f32 %v258, %v258
      %v313 = vmul.f32 %v259, %v259
      %v314 = vmul.f32 %v260, %v260
      %v315 = vmul.f32 %v261, %v261
      %v316 = vmul.f32 %v262, %v262
      %v317 = vmul.f32 %v263, %v263
      %v318 = vmul.f32 %v264, %v264
      %v319 = vmul.f32 %v265, %v265
      %v320 = vadd.f32 %v304, %v305
      %v321 = vadd.f32 %v320, %v306
      %v322 = vadd.f32 %v321, %v307
      %v323 = vadd.f32 %v322, %v308
      %v324 = vadd.f32 %v323, %v309
      %v325 = vadd.f32 %v324, %v310
      %v326 = vadd.f32 %v325, %v311
      %v327 = vadd.f32 %v326, %v312
      %v328 = vadd.f32 %v327, %v313
      %v329 = vadd.f32 %v328, %v314
      %v330 = vadd.f32 %v329, %v315
      %v331 = vadd.f32 %v330, %v316
      %v332 = vadd.f32 %v331, %v317
      %v333 = vadd.f32 %v332, %v318
      %v334 = vadd.f32 %v333, %v319
      %v335 = vrot.slane %v334, 4
      %v336 = vadd.f32 %v334, %v335
      %v337 = vrot.slane %v336, 2
      %v338 = vadd.f32 %v336, %v337
      %v339 = vrot.slane %v338, 1
      %v340 = vadd.f32 %v338, %v339
      %341 = vst [vmem:[#allocation7] sm:$0x1] %v340
    $region17: #{tpu_custom_call.1} parent=1 // pred_fallthru
      _
    // Predicated region
    $region18: #{tpu_custom_call.1} parent=1 // pred_check
      _
    $region19: #{tpu_custom_call.1} parent=1 // pred_check_branch
      %343 = sbr.rel (0) target = $region21
    $region20: #{tpu_custom_call.1} parent=1 // pred_region
      %345 = vsyncadd [#allocation4], 0
      %s346 = sshll.u32 [#allocation3], 4
      %s347 = int_to_ptr.vmem [resolvable:$true] %s346
      %s348 = sshll.u32 %s2, 4
      %s349 = int_to_ptr.hbm [resolvable:$true] %s348
      %354 = dma.vmem_to_hbm [thread:$0]  %s347, 2048, %s349, [#allocation4], 128, 128, 8
    $region21: #{tpu_custom_call.1} parent=1 // pred_fallthru
      _
    // Predicated region
    $region22: #{tpu_custom_call.1} parent=1 // pred_check
      _
    $region23: #{tpu_custom_call.1} parent=1 // pred_check_branch
      %356 = sbr.rel (0) target = $region25
    $region24: #{tpu_custom_call.1} parent=1 // pred_region
      %358 = vsyncadd [#allocation6], 0
      %s360 = sshll.u32 [#allocation5], 4
      %s361 = int_to_ptr.vmem [resolvable:$true] %s360
      %s362 = sshll.u32 %s3, 4
      %s363 = int_to_ptr.hbm [resolvable:$true] %s362
      %365 = dma.vmem_to_hbm [thread:$0]  %s361, 16, %s363, [#allocation6]
    $region25: #{tpu_custom_call.1} parent=1 // pred_fallthru
      _
    // Predicated region
    $region26: #{tpu_custom_call.1} parent=1 // pred_check
      _
    $region27: #{tpu_custom_call.1} parent=1 // pred_check_branch
      %367 = sbr.rel (0) target = $region29
    $region28: #{tpu_custom_call.1} parent=1 // pred_region
      %369 = vsyncadd [#allocation6], 0
      %s371 = sshll.u32 [#allocation7], 4
      %s372 = int_to_ptr.vmem [resolvable:$true] %s371
      %s373 = sshll.u32 %s4, 4
      %s374 = int_to_ptr.hbm [resolvable:$true] %s373
      %376 = dma.vmem_to_hbm [thread:$0]  %s372, 16, %s374, [#allocation6]
    $region29: #{tpu_custom_call.1} parent=1 // pred_fallthru
      _
    // Predicated region
    $region30: #{tpu_custom_call.1} parent=1 // pred_check
      _
    $region31: #{tpu_custom_call.1} parent=1 // pred_check_branch
      %378 = sbr.rel (0) target = $region33
    $region32: #{tpu_custom_call.1} parent=1 // pred_region
      %380 = dma.done [#allocation4], 2048
    $region33: #{tpu_custom_call.1} parent=1 // pred_fallthru
      _
    // Predicated region
    $region34: #{tpu_custom_call.1} parent=1 // pred_check
      _
    $region35: #{tpu_custom_call.1} parent=1 // pred_check_branch
      %382 = sbr.rel (0) target = $region37
    $region36: #{tpu_custom_call.1} parent=1 // pred_region
      %384 = dma.done [#allocation6], 16
    $region37: #{tpu_custom_call.1} parent=1 // pred_fallthru
      _
    // Predicated region
    $region38: #{tpu_custom_call.1} parent=1 // pred_check
      _
    $region39: #{tpu_custom_call.1} parent=1 // pred_check_branch
      %386 = sbr.rel (0) target = $region41
    $region40: #{tpu_custom_call.1} parent=1 // pred_region
      %388 = dma.done [#allocation6], 16
    $region41: #{tpu_custom_call.1} parent=1 // pred_fallthru
      _
    %389 = vsyncpa [#allocation4], 1
    %390 = vsyncpa [#allocation6], 1

</llo_original>
